<compile_context>
chip_gen: v7x
topology: tpu7x:2x2x1
jax: 0.10.0
libtpu: 0.0.40
codegen_flags: <defaults>
</compile_context>

<pallas_src>
import math

import numpy as np
import jax
import jax.numpy as jnp
from jax.experimental import pallas as pl
from jax.experimental.pallas import tpu as pltpu


def _make_attention_kernel(n_head, T, C, compute_dtype):
    hd = C // n_head

    def kernel(x_ref, wqkv_ref, bqkv_ref, wproj_ref, bproj_ref, o_ref):
        x = x_ref[0]                                                   # (T, C) bf16

        # One lane-dense QKV projection (N = 3C) feeding the full MXU width.
        # The 1/sqrt(hd) softmax scale is pre-folded into the q columns.
        qkv = jnp.dot(x, wqkv_ref[...],
                      preferred_element_type=jnp.float32) + bqkv_ref[...]   # (T, 3C) f32
        qkv = qkv.astype(compute_dtype)

        yh_parts = []
        # Static unroll over heads: all slices below are static (free).
        for h in range(n_head):
            q = qkv[:, h * hd:(h + 1) * hd]                            # (T, hd), scaled
            k = qkv[:, C + h * hd:C + (h + 1) * hd]                    # (T, hd)
            v = qkv[:, 2 * C + h * hd:2 * C + (h + 1) * hd]            # (T, hd)

            # q @ k^T contracting the last dims (no transpose materialized).
            # No mask: bias[:, :, T:, :T] is provably all-ones for the
            # broadcastable block_size configurations enforced in the wrapper.
            att = jax.lax.dot_general(q, k, (((1,), (1,)), ((), ())),
                                      preferred_element_type=jnp.float32)   # (T, T) f32

            # Numerically-stable softmax; the row-sum normalization is folded
            # into the small (T, hd) PV output instead of the (T, T) tile.
            att = att - jnp.max(att, axis=-1, keepdims=True)
            p = jnp.exp(att)                                           # f32 (portable)
            inv_l = pl.reciprocal(jnp.sum(p, axis=-1, keepdims=True),
                                  approx=False)                        # exact

            yh = jnp.dot(p.astype(compute_dtype), v,
                         preferred_element_type=jnp.float32) * inv_l   # (T, hd) f32
            yh_parts.append(yh.astype(compute_dtype))

        # (T, C) bf16 slab of all head outputs (static lane offsets).
        y = jnp.concatenate(yh_parts, axis=-1)

        # Single lane-dense output projection: K = C, N = C.
        out = jnp.dot(y, wproj_ref[...],
                      preferred_element_type=jnp.float32) + bproj_ref[...]  # (T, C) f32
        o_ref[0] = out.astype(o_ref.dtype)

    return kernel


def causal_self_attention(x, w_attn, b_attn, w_proj, b_proj, *, n_head,
                          block_size, compute_dtype=jnp.bfloat16):
    B, T, C = x.shape
    assert C % n_head == 0, "n_embd must be divisible by n_head"
    # torch's bias[:, :, T:, :T] only broadcasts when block_size - T is 1 or T,
    # and in both cases the slice is all-ones -> no masking.  Enforce that.
    assert (block_size - T) in (1, T), (
        "module's bias slice only broadcasts (and is then all-ones) when "
        "block_size - T is 1 or T")
    hd = C // n_head
    out_dtype = x.dtype
    scale = 1.0 / math.sqrt(hd)

    # ---- host-side weight prep (pure layout / constant folding) ----
    # Fold the softmax scale into the q columns of the fused qkv weight/bias.
    col_scale = jnp.concatenate([
        jnp.full((C,), scale, dtype=w_attn.dtype),
        jnp.ones((2 * C,), dtype=w_attn.dtype)])
    wqkv = (w_attn * col_scale[None, :]).astype(compute_dtype)     # (C, 3C)
    bqkv = (b_attn * col_scale[None, :]).astype(jnp.float32)       # (1, 3C)
    wproj = w_proj.astype(compute_dtype)                           # (C, C)
    bproj = b_proj.astype(jnp.float32)                             # (1, C)
    x_c = x.astype(compute_dtype)

    isz = lambda dt: np.dtype(dt).itemsize

    # Advisory cost estimate (weights now read once thanks to residency).
    flops = int(2 * B * T * C * 3 * C            # qkv projection
                + 4 * B * n_head * T * T * hd    # QK^T + PV
                + 2 * B * T * C * C)             # output projection
    transcendentals = int(B * n_head * T * T)    # exp
    weight_bytes = int((C * 3 * C + C * C) * isz(compute_dtype)
                       + (3 * C + C) * isz(jnp.float32))
    bytes_accessed = int(B * T * C * (isz(compute_dtype) + isz(out_dtype))
                         + weight_bytes)

    # VMEM budget derived from actual block sizes; capped at 40 MiB so the same
    # config fits v7x's 64 MiB physical VMEM with headroom (larger T needs the
    # flash-style tiling noted in the TODO above anyway).
    vmem_need = int(
        2 * T * C * isz(compute_dtype)                # x block, double-buffered
        + 2 * T * C * isz(out_dtype)                  # out block, double-buffered
        + 2 * weight_bytes                            # resident weights (conservative)
        + T * 3 * C * (4 + isz(compute_dtype))        # qkv intermediate (f32 + bf16)
        + 2 * T * T * 4                               # att / p tiles (one head live)
        + T * C * (isz(compute_dtype) + 4))           # y slab + f32 projection out
    vmem_limit = int(min(max(2 * vmem_need, 16 * 1024 * 1024), 40 * 1024 * 1024))

    grid_spec = pltpu.PrefetchScalarGridSpec(
        num_scalar_prefetch=0,
        grid=(B,),
        in_specs=[
            pl.BlockSpec((1, T, C), lambda b: (b, 0, 0)),     # x (per batch step)
            pl.BlockSpec((C, 3 * C), lambda b: (0, 0)),       # fused qkv weight, resident
            pl.BlockSpec((1, 3 * C), lambda b: (0, 0)),       # fused qkv bias, resident
            pl.BlockSpec((C, C), lambda b: (0, 0)),           # c_proj weight, resident
            pl.BlockSpec((1, C), lambda b: (0, 0)),           # c_proj bias, resident
        ],
        out_specs=pl.BlockSpec((1, T, C), lambda b: (b, 0, 0)),
    )

    return pl.pallas_call(
        _make_attention_kernel(n_head, T, C, compute_dtype),
        out_shape=jax.ShapeDtypeStruct((B, T, C), out_dtype),
        grid_spec=grid_spec,
        compiler_params=pltpu.CompilerParams(
            dimension_semantics=("parallel",),     # batch is megacore-parallel
            vmem_limit_bytes=vmem_limit,
        ),
        cost_estimate=pl.CostEstimate(flops=flops,
                                      transcendentals=transcendentals,
                                      bytes_accessed=bytes_accessed),
    )(x_c, wqkv, bqkv, wproj, bproj)


def _reference(x, w_attn, b_attn, w_proj, b_proj, n_head, block_size):
    # pure-JAX (f32) replica of the torch forward, including the bias slice
    B, T, C = x.shape
    hd = C // n_head
    qkv = x @ w_attn + b_attn
    q, k, v = jnp.split(qkv, 3, axis=-1)
    q = q.reshape(B, T, n_head, hd).transpose(0, 2, 1, 3)
    k = k.reshape(B, T, n_head, hd).transpose(0, 2, 1, 3)
    v = v.reshape(B, T, n_head, hd).transpose(0, 2, 1, 3)
    att = jnp.einsum('bhqd,bhkd->bhqk', q, k) * (1.0 / math.sqrt(hd))
    bias = jnp.tril(jnp.ones((block_size, block_size)))[None, None]
    mask = bias[:, :, T:, :T]
    att = jnp.where(mask == 0, -jnp.inf, att)
    att = jax.nn.softmax(att, axis=-1)
    y = jnp.einsum('bhqk,bhkd->bhqd', att, v)
    y = y.transpose(0, 2, 1, 3).reshape(B, T, C)
    return y @ w_proj + b_proj


if __name__ == "__main__":
    # config: small GPT-style shapes
    B, T, C, n_head = 2, 8, 32, 4
    block_size = 2 * T  # required for the module's bias slice to broadcast

    key = jax.random.PRNGKey(0)
    kx, k1, k2, k3, k4 = jax.random.split(key, 5)

    x = jax.random.normal(kx, (B, T, C), dtype=jnp.float32)
    # deterministic GPT-2-style init; linear weights stored as (in, out)
    w_attn = 0.02 * jax.random.normal(k1, (C, 3 * C), dtype=jnp.float32)
    b_attn = 0.02 * jax.random.normal(k2, (1, 3 * C), dtype=jnp.float32)
    w_proj = 0.02 * jax.random.normal(k3, (C, C), dtype=jnp.float32)
    b_proj = 0.02 * jax.random.normal(k4, (1, C), dtype=jnp.float32)

    out = causal_self_attention(x, w_attn, b_attn, w_proj, b_proj,
                                n_head=n_head, block_size=block_size)
    out = jax.block_until_ready(out)

    ref = _reference(x, w_attn, b_attn, w_proj, b_proj, n_head, block_size)
    # bf16 MXU feed vs. an all-f32 reference -> loose tolerance
    if not jnp.allclose(out.astype(jnp.float32), ref, rtol=2e-2, atol=1e-2):
        err = float(jnp.max(jnp.abs(out.astype(jnp.float32) - ref)))
        raise AssertionError(f"Pallas kernel output does not match reference (max err {err})")

    print("KERNEL_OK")
</pallas_src>

<mosaic_0001>
module attributes {stable_mosaic.version = 11 : i64} {
  func.func @kernel(%arg0: i32, %arg1: memref<1x8x32xbf16, #tpu.memory_space<vmem>>, %arg2: memref<32x96xbf16, #tpu.memory_space<vmem>>, %arg3: memref<1x96xf32, #tpu.memory_space<vmem>>, %arg4: memref<32x32xbf16, #tpu.memory_space<vmem>>, %arg5: memref<1x32xf32, #tpu.memory_space<vmem>>, %arg6: memref<1x8x32xf32, #tpu.memory_space<vmem>>) attributes {dimension_semantics = [#tpu.dimension_semantics<parallel>], iteration_bounds = array<i64: 2>, scalar_prefetch = 0 : i64, scratch_operands = 0 : i64, tpu.core_type = #tpu.core_type<tc>, window_params = [{transform_indices = @transform_0, window_bounds = array<i64: 1, 8, 32>}, {pipeline_mode = #tpu.pipeline_mode<synchronous>, transform_indices = @transform_1, window_bounds = array<i64: 32, 96>}, {pipeline_mode = #tpu.pipeline_mode<synchronous>, transform_indices = @transform_2, window_bounds = array<i64: 1, 96>}, {pipeline_mode = #tpu.pipeline_mode<synchronous>, transform_indices = @transform_3, window_bounds = array<i64: 32, 32>}, {pipeline_mode = #tpu.pipeline_mode<synchronous>, transform_indices = @transform_4, window_bounds = array<i64: 1, 32>}, {transform_indices = @transform_5, window_bounds = array<i64: 1, 8, 32>}]} {
    %c0 = arith.constant 0 : index
    %c0_0 = arith.constant 0 : index
    %c0_1 = arith.constant 0 : index
    %0 = vector.load %arg1[%c0, %c0_0, %c0_1] : memref<1x8x32xbf16, #tpu.memory_space<vmem>>, vector<1x8x32xbf16>
    %1 = vector.shape_cast %0 : vector<1x8x32xbf16> to vector<8x32xbf16>
    %c0_2 = arith.constant 0 : index
    %c0_3 = arith.constant 0 : index
    %2 = vector.load %arg2[%c0_2, %c0_3] : memref<32x96xbf16, #tpu.memory_space<vmem>>, vector<32x96xbf16>
    %cst = arith.constant dense<0.000000e+00> : vector<8x96xf32>
    %3 = tpu.matmul %1, %2, %cst {dimension_numbers = #tpu.dot_dimension_numbers<[1], [0], [0], [1], [0, 0, 1, 1], [], []>} : vector<8x32xbf16>, vector<32x96xbf16>, vector<8x96xf32> -> vector<8x96xf32>
    %c0_4 = arith.constant 0 : index
    %c0_5 = arith.constant 0 : index
    %4 = vector.load %arg3[%c0_4, %c0_5] : memref<1x96xf32, #tpu.memory_space<vmem>>, vector<1x96xf32>
    %5 = vector.broadcast %4 : vector<1x96xf32> to vector<8x96xf32>
    %6 = arith.addf %3, %5 : vector<8x96xf32>
    %7 = arith.truncf %6 : vector<8x96xf32> to vector<8x96xbf16>
    %8 = vector.extract_strided_slice %7 {offsets = [0, 0], sizes = [8, 8], strides = [1, 1]} : vector<8x96xbf16> to vector<8x8xbf16>
    %9 = vector.extract_strided_slice %7 {offsets = [0, 32], sizes = [8, 8], strides = [1, 1]} : vector<8x96xbf16> to vector<8x8xbf16>
    %10 = vector.extract_strided_slice %7 {offsets = [0, 64], sizes = [8, 8], strides = [1, 1]} : vector<8x96xbf16> to vector<8x8xbf16>
    %cst_6 = arith.constant dense<0.000000e+00> : vector<8x8xf32>
    %11 = tpu.matmul %8, %9, %cst_6 {dimension_numbers = #tpu.dot_dimension_numbers<[1], [1], [0], [0], [0, 0, 1, 0], [], []>} : vector<8x8xbf16>, vector<8x8xbf16>, vector<8x8xf32> -> vector<8x8xf32>
    %cst_7 = arith.constant dense<0xFF800000> : vector<8xf32>
    %12 = vector.multi_reduction <maximumf>, %11, %cst_7 [1] : vector<8x8xf32> to vector<8xf32>
    %13 = vector.shape_cast %12 : vector<8xf32> to vector<8x1xf32>
    %14 = vector.broadcast %13 : vector<8x1xf32> to vector<8x8xf32>
    %15 = arith.subf %11, %14 : vector<8x8xf32>
    %16 = math.exp %15 : vector<8x8xf32>
    %cst_8 = arith.constant dense<0.000000e+00> : vector<8xf32>
    %17 = vector.multi_reduction <add>, %16, %cst_8 [1] : vector<8x8xf32> to vector<8xf32>
    %18 = vector.shape_cast %17 : vector<8xf32> to vector<8x1xf32>
    %19 = tpu.reciprocal %18 : vector<8x1xf32> -> vector<8x1xf32>
    %20 = arith.truncf %16 : vector<8x8xf32> to vector<8x8xbf16>
    %cst_9 = arith.constant dense<0.000000e+00> : vector<8x8xf32>
    %21 = tpu.matmul %20, %10, %cst_9 {dimension_numbers = #tpu.dot_dimension_numbers<[1], [0], [0], [1], [0, 0, 1, 1], [], []>} : vector<8x8xbf16>, vector<8x8xbf16>, vector<8x8xf32> -> vector<8x8xf32>
    %22 = vector.broadcast %19 : vector<8x1xf32> to vector<8x8xf32>
    %23 = arith.mulf %21, %22 : vector<8x8xf32>
    %24 = arith.truncf %23 : vector<8x8xf32> to vector<8x8xbf16>
    %25 = vector.extract_strided_slice %7 {offsets = [0, 8], sizes = [8, 8], strides = [1, 1]} : vector<8x96xbf16> to vector<8x8xbf16>
    %26 = vector.extract_strided_slice %7 {offsets = [0, 40], sizes = [8, 8], strides = [1, 1]} : vector<8x96xbf16> to vector<8x8xbf16>
    %27 = vector.extract_strided_slice %7 {offsets = [0, 72], sizes = [8, 8], strides = [1, 1]} : vector<8x96xbf16> to vector<8x8xbf16>
    %cst_10 = arith.constant dense<0.000000e+00> : vector<8x8xf32>
    %28 = tpu.matmul %25, %26, %cst_10 {dimension_numbers = #tpu.dot_dimension_numbers<[1], [1], [0], [0], [0, 0, 1, 0], [], []>} : vector<8x8xbf16>, vector<8x8xbf16>, vector<8x8xf32> -> vector<8x8xf32>
    %cst_11 = arith.constant dense<0xFF800000> : vector<8xf32>
    %29 = vector.multi_reduction <maximumf>, %28, %cst_11 [1] : vector<8x8xf32> to vector<8xf32>
    %30 = vector.shape_cast %29 : vector<8xf32> to vector<8x1xf32>
    %31 = vector.broadcast %30 : vector<8x1xf32> to vector<8x8xf32>
    %32 = arith.subf %28, %31 : vector<8x8xf32>
    %33 = math.exp %32 : vector<8x8xf32>
    %cst_12 = arith.constant dense<0.000000e+00> : vector<8xf32>
    %34 = vector.multi_reduction <add>, %33, %cst_12 [1] : vector<8x8xf32> to vector<8xf32>
    %35 = vector.shape_cast %34 : vector<8xf32> to vector<8x1xf32>
    %36 = tpu.reciprocal %35 : vector<8x1xf32> -> vector<8x1xf32>
    %37 = arith.truncf %33 : vector<8x8xf32> to vector<8x8xbf16>
    %cst_13 = arith.constant dense<0.000000e+00> : vector<8x8xf32>
    %38 = tpu.matmul %37, %27, %cst_13 {dimension_numbers = #tpu.dot_dimension_numbers<[1], [0], [0], [1], [0, 0, 1, 1], [], []>} : vector<8x8xbf16>, vector<8x8xbf16>, vector<8x8xf32> -> vector<8x8xf32>
    %39 = vector.broadcast %36 : vector<8x1xf32> to vector<8x8xf32>
    %40 = arith.mulf %38, %39 : vector<8x8xf32>
    %41 = arith.truncf %40 : vector<8x8xf32> to vector<8x8xbf16>
    %42 = vector.extract_strided_slice %7 {offsets = [0, 16], sizes = [8, 8], strides = [1, 1]} : vector<8x96xbf16> to vector<8x8xbf16>
    %43 = vector.extract_strided_slice %7 {offsets = [0, 48], sizes = [8, 8], strides = [1, 1]} : vector<8x96xbf16> to vector<8x8xbf16>
    %44 = vector.extract_strided_slice %7 {offsets = [0, 80], sizes = [8, 8], strides = [1, 1]} : vector<8x96xbf16> to vector<8x8xbf16>
    %cst_14 = arith.constant dense<0.000000e+00> : vector<8x8xf32>
    %45 = tpu.matmul %42, %43, %cst_14 {dimension_numbers = #tpu.dot_dimension_numbers<[1], [1], [0], [0], [0, 0, 1, 0], [], []>} : vector<8x8xbf16>, vector<8x8xbf16>, vector<8x8xf32> -> vector<8x8xf32>
    %cst_15 = arith.constant dense<0xFF800000> : vector<8xf32>
    %46 = vector.multi_reduction <maximumf>, %45, %cst_15 [1] : vector<8x8xf32> to vector<8xf32>
    %47 = vector.shape_cast %46 : vector<8xf32> to vector<8x1xf32>
    %48 = vector.broadcast %47 : vector<8x1xf32> to vector<8x8xf32>
    %49 = arith.subf %45, %48 : vector<8x8xf32>
    %50 = math.exp %49 : vector<8x8xf32>
    %cst_16 = arith.constant dense<0.000000e+00> : vector<8xf32>
    %51 = vector.multi_reduction <add>, %50, %cst_16 [1] : vector<8x8xf32> to vector<8xf32>
    %52 = vector.shape_cast %51 : vector<8xf32> to vector<8x1xf32>
    %53 = tpu.reciprocal %52 : vector<8x1xf32> -> vector<8x1xf32>
    %54 = arith.truncf %50 : vector<8x8xf32> to vector<8x8xbf16>
    %cst_17 = arith.constant dense<0.000000e+00> : vector<8x8xf32>
    %55 = tpu.matmul %54, %44, %cst_17 {dimension_numbers = #tpu.dot_dimension_numbers<[1], [0], [0], [1], [0, 0, 1, 1], [], []>} : vector<8x8xbf16>, vector<8x8xbf16>, vector<8x8xf32> -> vector<8x8xf32>
    %56 = vector.broadcast %53 : vector<8x1xf32> to vector<8x8xf32>
    %57 = arith.mulf %55, %56 : vector<8x8xf32>
    %58 = arith.truncf %57 : vector<8x8xf32> to vector<8x8xbf16>
    %59 = vector.extract_strided_slice %7 {offsets = [0, 24], sizes = [8, 8], strides = [1, 1]} : vector<8x96xbf16> to vector<8x8xbf16>
    %60 = vector.extract_strided_slice %7 {offsets = [0, 56], sizes = [8, 8], strides = [1, 1]} : vector<8x96xbf16> to vector<8x8xbf16>
    %61 = vector.extract_strided_slice %7 {offsets = [0, 88], sizes = [8, 8], strides = [1, 1]} : vector<8x96xbf16> to vector<8x8xbf16>
    %cst_18 = arith.constant dense<0.000000e+00> : vector<8x8xf32>
    %62 = tpu.matmul %59, %60, %cst_18 {dimension_numbers = #tpu.dot_dimension_numbers<[1], [1], [0], [0], [0, 0, 1, 0], [], []>} : vector<8x8xbf16>, vector<8x8xbf16>, vector<8x8xf32> -> vector<8x8xf32>
    %cst_19 = arith.constant dense<0xFF800000> : vector<8xf32>
    %63 = vector.multi_reduction <maximumf>, %62, %cst_19 [1] : vector<8x8xf32> to vector<8xf32>
    %64 = vector.shape_cast %63 : vector<8xf32> to vector<8x1xf32>
    %65 = vector.broadcast %64 : vector<8x1xf32> to vector<8x8xf32>
    %66 = arith.subf %62, %65 : vector<8x8xf32>
    %67 = math.exp %66 : vector<8x8xf32>
    %cst_20 = arith.constant dense<0.000000e+00> : vector<8xf32>
    %68 = vector.multi_reduction <add>, %67, %cst_20 [1] : vector<8x8xf32> to vector<8xf32>
    %69 = vector.shape_cast %68 : vector<8xf32> to vector<8x1xf32>
    %70 = tpu.reciprocal %69 : vector<8x1xf32> -> vector<8x1xf32>
    %71 = arith.truncf %67 : vector<8x8xf32> to vector<8x8xbf16>
    %cst_21 = arith.constant dense<0.000000e+00> : vector<8x8xf32>
    %72 = tpu.matmul %71, %61, %cst_21 {dimension_numbers = #tpu.dot_dimension_numbers<[1], [0], [0], [1], [0, 0, 1, 1], [], []>} : vector<8x8xbf16>, vector<8x8xbf16>, vector<8x8xf32> -> vector<8x8xf32>
    %73 = vector.broadcast %70 : vector<8x1xf32> to vector<8x8xf32>
    %74 = arith.mulf %72, %73 : vector<8x8xf32>
    %75 = arith.truncf %74 : vector<8x8xf32> to vector<8x8xbf16>
    %76 = tpu.concatenate %24, %41, %58, %75 in 1 : vector<8x8xbf16>, vector<8x8xbf16>, vector<8x8xbf16>, vector<8x8xbf16> -> vector<8x32xbf16>
    %c0_22 = arith.constant 0 : index
    %c0_23 = arith.constant 0 : index
    %77 = vector.load %arg4[%c0_22, %c0_23] : memref<32x32xbf16, #tpu.memory_space<vmem>>, vector<32x32xbf16>
    %cst_24 = arith.constant dense<0.000000e+00> : vector<8x32xf32>
    %78 = tpu.matmul %76, %77, %cst_24 {dimension_numbers = #tpu.dot_dimension_numbers<[1], [0], [0], [1], [0, 0, 1, 1], [], []>} : vector<8x32xbf16>, vector<32x32xbf16>, vector<8x32xf32> -> vector<8x32xf32>
    %c0_25 = arith.constant 0 : index
    %c0_26 = arith.constant 0 : index
    %79 = vector.load %arg5[%c0_25, %c0_26] : memref<1x32xf32, #tpu.memory_space<vmem>>, vector<1x32xf32>
    %80 = vector.broadcast %79 : vector<1x32xf32> to vector<8x32xf32>
    %81 = arith.addf %78, %80 : vector<8x32xf32>
    %c0_27 = arith.constant 0 : index
    %c0_28 = arith.constant 0 : index
    %c0_29 = arith.constant 0 : index
    %82 = vector.load %arg6[%c0_27, %c0_28, %c0_29] : memref<1x8x32xf32, #tpu.memory_space<vmem>>, vector<1x8x32xf32>
    %83 = vector.shape_cast %82 : vector<1x8x32xf32> to vector<8x32xf32>
    %84 = vector.shape_cast %81 : vector<8x32xf32> to vector<1x8x32xf32>
    tpu.vector_store %arg6[%c0_27, %c0_28, %c0_29], %84 {strides = array<i32>} : memref<1x8x32xf32, #tpu.memory_space<vmem>>, vector<1x8x32xf32>,
    return
  }
  func.func @transform_0(%arg0: i32) -> (i32, i32, i32) {
    %c0_i32 = arith.constant 0 : i32
    %c0_i32_0 = arith.constant 0 : i32
    %c0_i32_1 = arith.constant 0 : i32
    return %arg0, %c0_i32, %c0_i32_0 : i32, i32, i32
  }
  func.func @transform_1(%arg0: i32) -> (i32, i32) {
    %c0_i32 = arith.constant 0 : i32
    %c0_i32_0 = arith.constant 0 : i32
    %c0_i32_1 = arith.constant 0 : i32
    return %c0_i32, %c0_i32_0 : i32, i32
  }
  func.func @transform_2(%arg0: i32) -> (i32, i32) {
    %c0_i32 = arith.constant 0 : i32
    %c0_i32_0 = arith.constant 0 : i32
    %c0_i32_1 = arith.constant 0 : i32
    return %c0_i32, %c0_i32_0 : i32, i32
  }
  func.func @transform_3(%arg0: i32) -> (i32, i32) {
    %c0_i32 = arith.constant 0 : i32
    %c0_i32_0 = arith.constant 0 : i32
    %c0_i32_1 = arith.constant 0 : i32
    return %c0_i32, %c0_i32_0 : i32, i32
  }
  func.func @transform_4(%arg0: i32) -> (i32, i32) {
    %c0_i32 = arith.constant 0 : i32
    %c0_i32_0 = arith.constant 0 : i32
    %c0_i32_1 = arith.constant 0 : i32
    return %c0_i32, %c0_i32_0 : i32, i32
  }
  func.func @transform_5(%arg0: i32) -> (i32, i32, i32) {
    %c0_i32 = arith.constant 0 : i32
    %c0_i32_0 = arith.constant 0 : i32
    %c0_i32_1 = arith.constant 0 : i32
    return %arg0, %c0_i32, %c0_i32_0 : i32, i32, i32
  }
}

</mosaic_0001>

<llo_original>
// kernel: tpu_custom_call.1
$region0: #{tpu_custom_call.1}
  #allocation0 [shape = 'u32[]', space=smem, size = 0x4, offset = 0x4, fixed_abs, tag = 'smem constant byte address 0x4 - core index']
  #allocation1 [shape = 'u32[144,128]{1,0:T(1,128)}', space=vmem, size = 0x12000, scoped, tag = 'internal scratch']
  %s0 = inlined_call_operand.hbm [shape: bf16[2,8,32], index: 0, kind: input, shape index: {}]
  %s1 = inlined_call_operand.hbm [shape: bf16[32,96], index: 1, kind: input, shape index: {}]
  %s2 = inlined_call_operand.vmem [shape: f32[1,96], index: 2, kind: input, shape index: {}]
  %s3 = inlined_call_operand.hbm [shape: bf16[32,32], index: 3, kind: input, shape index: {}]
  %s4 = inlined_call_operand.vmem [shape: f32[1,32], index: 4, kind: input, shape index: {}]
  %s5 = inlined_call_operand.hbm [shape: f32[2,8,32], index: 5, kind: output, shape index: {}]
  %s6 = sld [smem:[#allocation0]]
  $region65: #{tpu_custom_call.1} parent=0
    _
  %s8 = ssub.s32 1, %s6
  %s9 = scalar_select 0, %s8, %s6
  $region1: #{tpu_custom_call.1} parent=0
    #allocation2 [shape = 'u8[4096]{0}', space=vmem, size = 0x1000, scoped, tag = 'input window, operand 0']
    #allocation3 [shape = 's32[2]{0}', space=sflag, size = 0x8, scoped, tag = 'scoped memory for tpu_custom_call.1']
    #allocation4 [shape = 's32[2]{0}', space=sflag, size = 0x8, scoped, tag = 'scoped memory for tpu_custom_call.1']
    #allocation5 [shape = 'u8[8192]{0}', space=vmem, size = 0x2000, scoped, tag = 'input window, operand 1, single buffered']
    #allocation6 [shape = 's32[1]{0}', space=sflag, size = 0x4, scoped, tag = 'scoped memory for tpu_custom_call.1']
    #allocation7 [shape = 'u8[8192]{0}', space=vmem, size = 0x2000, scoped, tag = 'input window, operand 3, single buffered']
    #allocation8 [shape = 'u8[8192]{0}', space=vmem, size = 0x2000, scoped, tag = 'output window, operand 0']
    %10 = vsyncpa [#allocation3], 0
    %s11 = scalar_lea.sflag [#allocation3], 1
    %12 = vsyncpa %s11, 0
    %13 = vsyncpa [#allocation6], 0
    %14 = vsyncpa [#allocation4], 0
    %s15 = scalar_lea.sflag [#allocation4], 1
    %16 = vsyncpa %s15, 0
    loop: start=0, step=1, limit=4
    $region2: #{tpu_custom_call.1} parent=1 // loop_pre_header
      _
    $region3: #{tpu_custom_call.1} parent=1 // loop_header
      %s18 = sphi 0, %s22
      %p19 = scmp.ge.s32.totalorder %s18, 4
      %s28 = sphi 0, %s30
      %s31 = sphi 0, %s28
      %s32 = sphi 0, %s31
      %s48 = sphi 0, %s32
      %s52 = sphi 0, %s52
      %s54 = sphi 0, %s52
      %s55 = sphi 0, %s54
      %s69 = sphi 0, %s55
      %s73 = sphi 0, %s73
      %s75 = sphi 0, %s73
      %s76 = sphi 0, %s75
      %s90 = sphi 0, %s76
      %s94 = sphi 0, %s94
      %s96 = sphi 0, %s94
      %s97 = sphi 0, %s96
      %s111 = sphi 0, %s97
      %s115 = sphi 0, %s115
      %s117 = sphi 0, %s115
      %s118 = sphi 0, %s117
      %s132 = sphi 0, %s118
      %s138 = sphi 0, %s140
      %s141 = sphi 0, %s138
      %s142 = sphi 0, %s141
      %s158 = sphi 0, %s142
    $region4: #{tpu_custom_call.1} parent=1 // loop_header_branch
      %21 = sbr.rel (%p19) target = $region8
    $region5: #{tpu_custom_call.1} parent=1 // loop_body
      %s23 = ssub.s32 %s18, 1
      %s24 = ssub.s32 %s18, 2
      %s25 = sadd.s32 %s18, 1
      %s26 = ssub.s32 %s18, %s25
      %p27 = scmp.eq.s32.totalorder %s26, 0
      %s29 = sadd.s32 %s28, 1
      %s30 = scalar_select %p27, %s28, %s29
      %p33 = pneg %p27
      %p34 = scmp.eq.s32.totalorder %s18, 1
      %p35 = por %p33, %p34
      %p36 = scmp.ne.s32.totalorder %s28, %s31
      %p37 = scmp.eq.s32.totalorder %s18, 0
      %p38 = por %p36, %p37
      %p39 = scmp.ne.s32.totalorder %s28, %s31
      %p40 = scmp.eq.s32.totalorder %s23, 1
      %p41 = por %p39, %p40
      %p42 = scmp.ne.s32.totalorder %s31, %s32
      %p43 = scmp.eq.s32.totalorder %s23, 0
      %p44 = por %p42, %p43
      %p45 = scmp.ne.s32.totalorder %s31, %s32
      %p46 = scmp.eq.s32.totalorder %s24, 1
      %p47 = por %p45, %p46
      %p49 = scmp.ne.s32.totalorder %s32, %s48
      %p50 = scmp.eq.s32.totalorder %s24, 0
      %p51 = por %p49, %p50
      %s53 = sadd.s32 %s52, 1
      %p56 = scmp.eq.s32.totalorder %s18, 1
      %p57 = scmp.ne.s32.totalorder %s52, %s54
      %p58 = scmp.eq.s32.totalorder %s18, 0
      %p59 = por %p57, %p58
      %p60 = scmp.ne.s32.totalorder %s52, %s54
      %p61 = scmp.eq.s32.totalorder %s23, 1
      %p62 = por %p60, %p61
      %p63 = scmp.ne.s32.totalorder %s54, %s55
      %p64 = scmp.eq.s32.totalorder %s23, 0
      %p65 = por %p63, %p64
      %p66 = scmp.ne.s32.totalorder %s54, %s55
      %p67 = scmp.eq.s32.totalorder %s24, 1
      %p68 = por %p66, %p67
      %p70 = scmp.ne.s32.totalorder %s55, %s69
      %p71 = scmp.eq.s32.totalorder %s24, 0
      %p72 = por %p70, %p71
      %s74 = sadd.s32 %s73, 1
      %p77 = scmp.eq.s32.totalorder %s18, 1
      %p78 = scmp.ne.s32.totalorder %s73, %s75
      %p79 = scmp.eq.s32.totalorder %s18, 0
      %p80 = por %p78, %p79
      %p81 = scmp.ne.s32.totalorder %s73, %s75
      %p82 = scmp.eq.s32.totalorder %s23, 1
      %p83 = por %p81, %p82
      %p84 = scmp.ne.s32.totalorder %s75, %s76
      %p85 = scmp.eq.s32.totalorder %s23, 0
      %p86 = por %p84, %p85
      %p87 = scmp.ne.s32.totalorder %s75, %s76
      %p88 = scmp.eq.s32.totalorder %s24, 1
      %p89 = por %p87, %p88
      %p91 = scmp.ne.s32.totalorder %s76, %s90
      %p92 = scmp.eq.s32.totalorder %s24, 0
      %p93 = por %p91, %p92
      %s95 = sadd.s32 %s94, 1
      %p98 = scmp.eq.s32.totalorder %s18, 1
      %p99 = scmp.ne.s32.totalorder %s94, %s96
      %p100 = scmp.eq.s32.totalorder %s18, 0
      %p101 = por %p99, %p100
      %p102 = scmp.ne.s32.totalorder %s94, %s96
      %p103 = scmp.eq.s32.totalorder %s23, 1
      %p104 = por %p102, %p103
      %p105 = scmp.ne.s32.totalorder %s96, %s97
      %p106 = scmp.eq.s32.totalorder %s23, 0
      %p107 = por %p105, %p106
      %p108 = scmp.ne.s32.totalorder %s96, %s97
      %p109 = scmp.eq.s32.totalorder %s24, 1
      %p110 = por %p108, %p109
      %p112 = scmp.ne.s32.totalorder %s97, %s111
      %p113 = scmp.eq.s32.totalorder %s24, 0
      %p114 = por %p112, %p113
      %s116 = sadd.s32 %s115, 1
      %p119 = scmp.eq.s32.totalorder %s18, 1
      %p120 = scmp.ne.s32.totalorder %s115, %s117
      %p121 = scmp.eq.s32.totalorder %s18, 0
      %p122 = por %p120, %p121
      %p123 = scmp.ne.s32.totalorder %s115, %s117
      %p124 = scmp.eq.s32.totalorder %s23, 1
      %p125 = por %p123, %p124
      %p126 = scmp.ne.s32.totalorder %s117, %s118
      %p127 = scmp.eq.s32.totalorder %s23, 0
      %p128 = por %p126, %p127
      %p129 = scmp.ne.s32.totalorder %s117, %s118
      %p130 = scmp.eq.s32.totalorder %s24, 1
      %p131 = por %p129, %p130
      %p133 = scmp.ne.s32.totalorder %s118, %s132
      %p134 = scmp.eq.s32.totalorder %s24, 0
      %p135 = por %p133, %p134
      %s136 = ssub.s32 %s18, %s25
      %p137 = scmp.eq.s32.totalorder %s136, 0
      %s139 = sadd.s32 %s138, 1
      %s140 = scalar_select %p137, %s138, %s139
      %p143 = pneg %p137
      %p144 = scmp.eq.s32.totalorder %s18, 1
      %p145 = por %p143, %p144
      %p146 = scmp.ne.s32.totalorder %s138, %s141
      %p147 = scmp.eq.s32.totalorder %s18, 0
      %p148 = por %p146, %p147
      %p149 = scmp.ne.s32.totalorder %s138, %s141
      %p150 = scmp.eq.s32.totalorder %s23, 1
      %p151 = por %p149, %p150
      %p152 = scmp.ne.s32.totalorder %s141, %s142
      %p153 = scmp.eq.s32.totalorder %s23, 0
      %p154 = por %p152, %p153
      %p155 = scmp.ne.s32.totalorder %s141, %s142
      %p156 = scmp.eq.s32.totalorder %s24, 1
      %p157 = por %p155, %p156
      %p159 = scmp.ne.s32.totalorder %s142, %s158
      %p160 = scmp.eq.s32.totalorder %s24, 0
      %p161 = por %p159, %p160
      %p162 = scmp.le.s32.totalorder 1, %s18
      %p163 = scmp.lt.s32.totalorder %s18, 3
      %p164 = pnand %p162, %p163
      %p165 = pneg %p164
      // Predicated region
      $region9: #{tpu_custom_call.1} parent=5 // pred_check
        _
      $region10: #{tpu_custom_call.1} parent=5 // pred_check_branch
        %167 = sbr.rel (%p164) target = $region12
      $region11: #{tpu_custom_call.1} parent=5 // pred_region
        %s168 = ssub.s32 %s18, 1
        // Predicated region
        $region13: #{tpu_custom_call.1} parent=11 // pred_check
          %p169 = pneg %p65
        $region14: #{tpu_custom_call.1} parent=11 // pred_check_branch
          %171 = sbr.rel (%p169) target = $region16
        $region15: #{tpu_custom_call.1} parent=11 // pred_region
          %s173 = ssub.s32 256, 256
          %174 = vsyncadd [#allocation6], %s173
          %s175 = sshll.u32 [#allocation5], 4
          %s176 = int_to_ptr.vmem [resolvable:$true] %s175
          %181 = dma.hbm_to_vmem [thread:$0]  %s1, 256, %s176, [#allocation6], 64, 64, 4
        $region16: #{tpu_custom_call.1} parent=11 // pred_fallthru
          _
        // Predicated region
        $region17: #{tpu_custom_call.1} parent=11 // pred_check
          %p182 = pneg %p86
        $region18: #{tpu_custom_call.1} parent=11 // pred_check_branch
          %184 = sbr.rel (%p182) target = $region20
        $region19: #{tpu_custom_call.1} parent=11 // pred_region
          _
        $region20: #{tpu_custom_call.1} parent=11 // pred_fallthru
          _
        // Predicated region
        $region21: #{tpu_custom_call.1} parent=11 // pred_check
          %p185 = pneg %p107
        $region22: #{tpu_custom_call.1} parent=11 // pred_check_branch
          %187 = sbr.rel (%p185) target = $region24
        $region23: #{tpu_custom_call.1} parent=11 // pred_region
          %s189 = ssub.s32 256, 256
          %190 = vsyncadd [#allocation6], %s189
          %s191 = sshll.u32 [#allocation7], 4
          %s192 = int_to_ptr.vmem [resolvable:$true] %s191
          %197 = dma.hbm_to_vmem [thread:$0]  %s3, 256, %s192, [#allocation6], 64, 64, 4
        $region24: #{tpu_custom_call.1} parent=11 // pred_fallthru
          _
        // Predicated region
        $region25: #{tpu_custom_call.1} parent=11 // pred_check
          %p198 = pneg %p128
        $region26: #{tpu_custom_call.1} parent=11 // pred_check_branch
          %200 = sbr.rel (%p198) target = $region28
        $region27: #{tpu_custom_call.1} parent=11 // pred_region
          _
        $region28: #{tpu_custom_call.1} parent=11 // pred_fallthru
          _
      $region12: #{tpu_custom_call.1} parent=5 // pred_fallthru
        _
      %p201 = scmp.lt.s32.totalorder %s18, 2
      // Predicated region
      $region29: #{tpu_custom_call.1} parent=5 // pred_check
        %p202 = pneg %p201
      $region30: #{tpu_custom_call.1} parent=5 // pred_check_branch
        %204 = sbr.rel (%p202) target = $region32
      $region31: #{tpu_custom_call.1} parent=5 // pred_region
        // Predicated region
        $region33: #{tpu_custom_call.1} parent=31 // pred_check
          %p205 = pneg %p38
        $region34: #{tpu_custom_call.1} parent=31 // pred_check_branch
          %207 = sbr.rel (%p205) target = $region36
        $region35: #{tpu_custom_call.1} parent=31 // pred_region
          %s208 = sand.u32 %s28, 1
          %s209 = scalar_lea.sflag [#allocation3], %s208
          %s210 = sand.u32 %s28, 1
          %s211 = smul.addr %s210, 4
          %s212 = scalar_lea.vmem [#allocation2], %s211
          %s214 = ssub.s32 64, 64
          %215 = vsyncadd %s209, %s214
          %s216 = smul.addr %s18, 64
          %s217 = scalar_lea.hbm %s0, %s216
          %s219 = sshll.u32 %s212, 4
          %s220 = int_to_ptr.vmem [resolvable:$true] %s219
          %222 = dma.hbm_to_vmem [thread:$0]  %s217, 64, %s220, %s209
        $region36: #{tpu_custom_call.1} parent=31 // pred_fallthru
          _
      $region32: #{tpu_custom_call.1} parent=5 // pred_fallthru
        _
      %p223 = scmp.le.s32.totalorder 1, %s18
      %p224 = scmp.lt.s32.totalorder %s18, 3
      %p225 = pnand %p223, %p224
      %p226 = pneg %p225
      // Predicated region
      $region37: #{tpu_custom_call.1} parent=5 // pred_check
        _
      $region38: #{tpu_custom_call.1} parent=5 // pred_check_branch
        %228 = sbr.rel (%p225) target = $region40
      $region39: #{tpu_custom_call.1} parent=5 // pred_region
        %s229 = ssub.s32 %s18, 1
        %s230 = sand.u32 %s31, 1
        %s231 = scalar_lea.sflag [#allocation3], %s230
        %s232 = sand.u32 %s31, 1
        %s233 = smul.addr %s232, 4
        %s234 = scalar_lea.vmem [#allocation2], %s233
        // Predicated region
        $region41: #{tpu_custom_call.1} parent=39 // pred_check
          %p235 = pneg %p44
        $region42: #{tpu_custom_call.1} parent=39 // pred_check_branch
          %237 = sbr.rel (%p235) target = $region44
        $region43: #{tpu_custom_call.1} parent=39 // pred_region
          %238 = dma.done %s231, 64
        $region44: #{tpu_custom_call.1} parent=39 // pred_fallthru
          _
        // Predicated region
        $region45: #{tpu_custom_call.1} parent=39 // pred_check
          %p239 = pneg %p65
        $region46: #{tpu_custom_call.1} parent=39 // pred_check_branch
          %241 = sbr.rel (%p239) target = $region48
        $region47: #{tpu_custom_call.1} parent=39 // pred_region
          %242 = dma.done [#allocation6], 256
        $region48: #{tpu_custom_call.1} parent=39 // pred_fallthru
          _
        // Predicated region
        $region49: #{tpu_custom_call.1} parent=39 // pred_check
          %p243 = pneg %p107
        $region50: #{tpu_custom_call.1} parent=39 // pred_check_branch
          %245 = sbr.rel (%p243) target = $region52
        $region51: #{tpu_custom_call.1} parent=39 // pred_region
          %246 = dma.done [#allocation6], 256
        $region52: #{tpu_custom_call.1} parent=39 // pred_fallthru
          _
        %s247 = sand.u32 %s31, 1
        %s248 = scalar_lea.sflag [#allocation3], %s247
        %s249 = sand.u32 %s31, 1
        %s250 = smul.addr %s249, 4
        %s251 = scalar_lea.vmem [#allocation2], %s250
        %p252 = pneg %p44
        %p253 = pneg %p41
        %p254 = pneg %p65
        %p255 = pneg %p62
        %p256 = pneg %p86
        %p257 = pneg %p83
        %p258 = pneg %p107
        %p259 = pneg %p104
        %p260 = pneg %p128
        %p261 = pneg %p125
        %p262 = pneg %p154
        %p263 = pneg %p151
        %s264 = sand.u32 %s141, 1
        %s265 = scalar_lea.sflag [#allocation4], %s264
        %s266 = sand.u32 %s141, 1
        %s267 = smul.addr %s266, 8
        %s268 = scalar_lea.vmem [#allocation8], %s267
        %v270 = vld [vmem:[%s234] sm:$0xf]
        %v271 = vld [vmem:[#allocation5] sm:$0xf]
        %v272 = vld [vmem:[#allocation5 + $0x4] sm:$0xf]
        %v273 = vld [vmem:[#allocation5 + $0x8] sm:$0xf]
        %v274 = vld [vmem:[#allocation5 + $0xc] sm:$0xf]
        %v275 = vld [vmem:[%s2] sm:$0x1]
        %v277 = vlaneseq
        %v278 = vshrl.u32 %v277, 7
        %v279 = vsub.s32 0, %v278
        %v280 = vrot.slane %v275, %v279
        %v286 = vunpack.c.l.b16 %v271
        %v287 = vunpack.c.l.b16 %v272
        %v288 = vunpack.c.l.b16 %v273
        %v289 = vunpack.c.l.b16 %v274
        %v290 = vpack.c.b16 %v287, %v286
        %v291 = vpack.c.b16 %v289, %v288
        %vm294 = vcmask 261120
        %v296 = vsel %vm294, %v270, 0
        %298 = vmatprep.subr.bf16.mxu0 0
        %299 = vmatpush1.bf16.msra.mxu0 %v290
        %300 = vmatprep.subr.bf16.mxu0 0
        %301 = vmatpush1.bf16.msra.mxu0 %v291
        %302 = vmatprep.subr.bf16.mxu0 0
        %303 = vmatpush1.bf16.msra.mxu0 0
        %304 = vmatprep.subr.bf16.mxu0 0
        %305 = vmatpush1.bf16.msra.mxu0 0
        %306 = vmatprep.subr.bf16.mxu0 0
        %307 = vmatpush1.bf16.msra.mxu0 0
        %308 = vmatprep.subr.bf16.mxu0 0
        %309 = vmatpush1.bf16.msra.mxu0 0
        %310 = vmatprep.subr.bf16.mxu0 0
        %311 = vmatpush1.bf16.msra.mxu0 0
        %312 = vmatprep.subr.bf16.mxu0 0
        %313 = vmatpush1.bf16.msra.mxu0 0
        %314 = vmatprep.subr.bf16.mxu0 0
        %315 = vmatpush1.bf16.msra.mxu0 0
        %316 = vmatprep.subr.bf16.mxu0 0
        %317 = vmatpush1.bf16.msra.mxu0 0
        %318 = vmatprep.subr.bf16.mxu0 0
        %319 = vmatpush1.bf16.msra.mxu0 0
        %320 = vmatprep.subr.bf16.mxu0 0
        %321 = vmatpush1.bf16.msra.mxu0 0
        %322 = vmatprep.subr.bf16.mxu0 0
        %323 = vmatpush1.bf16.msra.mxu0 0
        %324 = vmatprep.subr.bf16.mxu0 0
        %325 = vmatpush1.bf16.msra.mxu0 0
        %326 = vmatprep.subr.bf16.mxu0 0
        %327 = vmatpush1.bf16.msra.mxu0 0
        %328 = vmatprep.subr.bf16.mxu0 0
        %329 = vmatpush1.bf16.msra.mxu0 0
        %330 = vmatprep.mubr.bf16.mxu0 0
        %331 = vmatmul.mubr.bf16.gmra.mrb[0].mxu0 %v296
        %v332 = vpop.f32.mrb[0].mxu0
        %v333 = vadd.f32 %v280, %v332
        %v334 = vpop.f32.mrb[0].mxu0
        %v335 = vpop.f32.mrb[0].mxu0
        %v336 = vpop.f32.mrb[0].mxu0
        %337 = vdwg.mxu0
        %v338 = vpack.c.bf16 %v333, %v333
        %340 = vrot.lane.b32.xlu0 %v338, 96
        %v341 = vpop.permute.xlu0 %340
        %vm342 = vcmask 64512
        %v344 = vsel %vm342, %v338, 0
        %v347 = vsel %vm342, %v341, 0
        %349 = vmatprep.subr.bf16.mxu0 0
        %350 = vmatpush1.bf16.xpose.msra.mxu0 %v347
        %351 = vmatprep.subr.bf16.mxu0 0
        %352 = vmatpush1.bf16.xpose.msra.mxu0 0
        %353 = vmatprep.subr.bf16.mxu0 0
        %354 = vmatpush1.bf16.xpose.msra.mxu0 0
        %355 = vmatprep.subr.bf16.mxu0 0
        %356 = vmatpush1.bf16.xpose.msra.mxu0 0
        %357 = vmatprep.subr.bf16.mxu0 0
        %358 = vmatpush1.bf16.xpose.msra.mxu0 0
        %359 = vmatprep.subr.bf16.mxu0 0
        %360 = vmatpush1.bf16.xpose.msra.mxu0 0
        %361 = vmatprep.subr.bf16.mxu0 0
        %362 = vmatpush1.bf16.xpose.msra.mxu0 0
        %363 = vmatprep.subr.bf16.mxu0 0
        %364 = vmatpush1.bf16.xpose.msra.mxu0 0
        %365 = vmatprep.subr.bf16.mxu0 0
        %366 = vmatpush1.bf16.xpose.msra.mxu0 0
        %367 = vmatprep.subr.bf16.mxu0 0
        %368 = vmatpush1.bf16.xpose.msra.mxu0 0
        %369 = vmatprep.subr.bf16.mxu0 0
        %370 = vmatpush1.bf16.xpose.msra.mxu0 0
        %371 = vmatprep.subr.bf16.mxu0 0
        %372 = vmatpush1.bf16.xpose.msra.mxu0 0
        %373 = vmatprep.subr.bf16.mxu0 0
        %374 = vmatpush1.bf16.xpose.msra.mxu0 0
        %375 = vmatprep.subr.bf16.mxu0 0
        %376 = vmatpush1.bf16.xpose.msra.mxu0 0
        %377 = vmatprep.subr.bf16.mxu0 0
        %378 = vmatpush1.bf16.xpose.msra.mxu0 0
        %379 = vmatprep.subr.bf16.mxu0 0
        %380 = vmatpush1.bf16.xpose.msra.mxu0 0
        %381 = vmatprep.mubr.bf16.mxu0 0
        %382 = vmatmul.mubr.bf16.gmra.mrb[0].mxu0 %v344
        %v383 = vpop.f32.mrb[0].mxu0
        %v384 = vadd.f32 0.0, %v383
        %v385 = vpop.f32.mrb[0].mxu0
        %v386 = vpop.f32.mrb[0].mxu0
        %v387 = vpop.f32.mrb[0].mxu0
        %388 = vdwg.mxu0
        %v389 = vsel %vm342, %v384, -inf
        %390 = vmax.xlane.f32.xlu0 %v389
        %v391 = vpop.xlane.xlu0 %390
        %v392 = vsub.f32 %v384, %v391
        %v393 = vmul.f32 %v392, 1.442695
        %v394 = vpow.pop %v393
        %v395 = vsel %vm342, %v394, 0.0
        %396 = vadd.xlane.f32.xlu0 %v395
        %v397 = vpop.xlane.xlu0 %396
        %v398 = vrcp.pop %v397
        %v399 = vpack.c.bf16 %v394, %v394
        %400 = vrot.lane.b32.xlu0 %v338, 64
        %v401 = vpop.permute.xlu0 %400
        %v403 = vsel %vm342, %v399, 0
        %vm405 = vcmask 1043456
        %v407 = vsel %vm405, %v401, 0
        %409 = vmatprep.subr.bf16.mxu0 0
        %410 = vmatpush1.bf16.msra.mxu0 %v407
        %411 = vmatprep.subr.bf16.mxu0 0
        %412 = vmatpush1.bf16.msra.mxu0 0
        %413 = vmatprep.subr.bf16.mxu0 0
        %414 = vmatpush1.bf16.msra.mxu0 0
        %415 = vmatprep.subr.bf16.mxu0 0
        %416 = vmatpush1.bf16.msra.mxu0 0
        %417 = vmatprep.subr.bf16.mxu0 0
        %418 = vmatpush1.bf16.msra.mxu0 0
        %419 = vmatprep.subr.bf16.mxu0 0
        %420 = vmatpush1.bf16.msra.mxu0 0
        %421 = vmatprep.subr.bf16.mxu0 0
        %422 = vmatpush1.bf16.msra.mxu0 0
        %423 = vmatprep.subr.bf16.mxu0 0
        %424 = vmatpush1.bf16.msra.mxu0 0
        %425 = vmatprep.subr.bf16.mxu0 0
        %426 = vmatpush1.bf16.msra.mxu0 0
        %427 = vmatprep.subr.bf16.mxu0 0
        %428 = vmatpush1.bf16.msra.mxu0 0
        %429 = vmatprep.subr.bf16.mxu0 0
        %430 = vmatpush1.bf16.msra.mxu0 0
        %431 = vmatprep.subr.bf16.mxu0 0
        %432 = vmatpush1.bf16.msra.mxu0 0
        %433 = vmatprep.subr.bf16.mxu0 0
        %434 = vmatpush1.bf16.msra.mxu0 0
        %435 = vmatprep.subr.bf16.mxu0 0
        %436 = vmatpush1.bf16.msra.mxu0 0
        %437 = vmatprep.subr.bf16.mxu0 0
        %438 = vmatpush1.bf16.msra.mxu0 0
        %439 = vmatprep.subr.bf16.mxu0 0
        %440 = vmatpush1.bf16.msra.mxu0 0
        %441 = vmatprep.mubr.bf16.mxu0 0
        %442 = vmatmul.mubr.bf16.gmra.mrb[0].mxu0 %v403
        %v443 = vpop.f32.mrb[0].mxu0
        %v444 = vadd.f32 0.0, %v443
        %v445 = vpop.f32.mrb[0].mxu0
        %v446 = vpop.f32.mrb[0].mxu0
        %v447 = vpop.f32.mrb[0].mxu0
        %448 = vdwg.mxu0
        %v449 = vmul.f32 %v444, %v398
        %v450 = vpack.c.bf16 %v449, %v449
        %451 = vrot.lane.b32.xlu0 %v338, 120
        %v452 = vpop.permute.xlu0 %451
        %453 = vrot.lane.b32.xlu0 %v338, 88
        %v454 = vpop.permute.xlu0 %453
        %v456 = vsel %vm342, %v452, 0
        %v459 = vsel %vm342, %v454, 0
        %461 = vmatprep.subr.bf16.mxu0 0
        %462 = vmatpush1.bf16.xpose.msra.mxu0 %v459
        %463 = vmatprep.subr.bf16.mxu0 0
        %464 = vmatpush1.bf16.xpose.msra.mxu0 0
        %465 = vmatprep.subr.bf16.mxu0 0
        %466 = vmatpush1.bf16.xpose.msra.mxu0 0
        %467 = vmatprep.subr.bf16.mxu0 0
        %468 = vmatpush1.bf16.xpose.msra.mxu0 0
        %469 = vmatprep.subr.bf16.mxu0 0
        %470 = vmatpush1.bf16.xpose.msra.mxu0 0
        %471 = vmatprep.subr.bf16.mxu0 0
        %472 = vmatpush1.bf16.xpose.msra.mxu0 0
        %473 = vmatprep.subr.bf16.mxu0 0
        %474 = vmatpush1.bf16.xpose.msra.mxu0 0
        %475 = vmatprep.subr.bf16.mxu0 0
        %476 = vmatpush1.bf16.xpose.msra.mxu0 0
        %477 = vmatprep.subr.bf16.mxu0 0
        %478 = vmatpush1.bf16.xpose.msra.mxu0 0
        %479 = vmatprep.subr.bf16.mxu0 0
        %480 = vmatpush1.bf16.xpose.msra.mxu0 0
        %481 = vmatprep.subr.bf16.mxu0 0
        %482 = vmatpush1.bf16.xpose.msra.mxu0 0
        %483 = vmatprep.subr.bf16.mxu0 0
        %484 = vmatpush1.bf16.xpose.msra.mxu0 0
        %485 = vmatprep.subr.bf16.mxu0 0
        %486 = vmatpush1.bf16.xpose.msra.mxu0 0
        %487 = vmatprep.subr.bf16.mxu0 0
        %488 = vmatpush1.bf16.xpose.msra.mxu0 0
        %489 = vmatprep.subr.bf16.mxu0 0
        %490 = vmatpush1.bf16.xpose.msra.mxu0 0
        %491 = vmatprep.subr.bf16.mxu0 0
        %492 = vmatpush1.bf16.xpose.msra.mxu0 0
        %493 = vmatprep.mubr.bf16.mxu0 0
        %494 = vmatmul.mubr.bf16.gmra.mrb[0].mxu0 %v456
        %v495 = vpop.f32.mrb[0].mxu0
        %v496 = vadd.f32 0.0, %v495
        %v497 = vpop.f32.mrb[0].mxu0
        %v498 = vpop.f32.mrb[0].mxu0
        %v499 = vpop.f32.mrb[0].mxu0
        %500 = vdwg.mxu0
        %v501 = vsel %vm342, %v496, -inf
        %502 = vmax.xlane.f32.xlu0 %v501
        %v503 = vpop.xlane.xlu0 %502
        %v504 = vsub.f32 %v496, %v503
        %v505 = vmul.f32 %v504, 1.442695
        %v506 = vpow.pop %v505
        %v507 = vsel %vm342, %v506, 0.0
        %508 = vadd.xlane.f32.xlu0 %v507
        %v509 = vpop.xlane.xlu0 %508
        %v510 = vrcp.pop %v509
        %v511 = vpack.c.bf16 %v506, %v506
        %512 = vrot.lane.b32.xlu0 %v338, 56
        %v513 = vpop.permute.xlu0 %512
        %v515 = vsel %vm342, %v511, 0
        %v518 = vsel %vm405, %v513, 0
        %520 = vmatprep.subr.bf16.mxu0 0
        %521 = vmatpush1.bf16.msra.mxu0 %v518
        %522 = vmatprep.subr.bf16.mxu0 0
        %523 = vmatpush1.bf16.msra.mxu0 0
        %524 = vmatprep.subr.bf16.mxu0 0
        %525 = vmatpush1.bf16.msra.mxu0 0
        %526 = vmatprep.subr.bf16.mxu0 0
        %527 = vmatpush1.bf16.msra.mxu0 0
        %528 = vmatprep.subr.bf16.mxu0 0
        %529 = vmatpush1.bf16.msra.mxu0 0
        %530 = vmatprep.subr.bf16.mxu0 0
        %531 = vmatpush1.bf16.msra.mxu0 0
        %532 = vmatprep.subr.bf16.mxu0 0
        %533 = vmatpush1.bf16.msra.mxu0 0
        %534 = vmatprep.subr.bf16.mxu0 0
        %535 = vmatpush1.bf16.msra.mxu0 0
        %536 = vmatprep.subr.bf16.mxu0 0
        %537 = vmatpush1.bf16.msra.mxu0 0
        %538 = vmatprep.subr.bf16.mxu0 0
        %539 = vmatpush1.bf16.msra.mxu0 0
        %540 = vmatprep.subr.bf16.mxu0 0
        %541 = vmatpush1.bf16.msra.mxu0 0
        %542 = vmatprep.subr.bf16.mxu0 0
        %543 = vmatpush1.bf16.msra.mxu0 0
        %544 = vmatprep.subr.bf16.mxu0 0
        %545 = vmatpush1.bf16.msra.mxu0 0
        %546 = vmatprep.subr.bf16.mxu0 0
        %547 = vmatpush1.bf16.msra.mxu0 0
        %548 = vmatprep.subr.bf16.mxu0 0
        %549 = vmatpush1.bf16.msra.mxu0 0
        %550 = vmatprep.subr.bf16.mxu0 0
        %551 = vmatpush1.bf16.msra.mxu0 0
        %552 = vmatprep.mubr.bf16.mxu0 0
        %553 = vmatmul.mubr.bf16.gmra.mrb[0].mxu0 %v515
        %v554 = vpop.f32.mrb[0].mxu0
        %v555 = vadd.f32 0.0, %v554
        %v556 = vpop.f32.mrb[0].mxu0
        %v557 = vpop.f32.mrb[0].mxu0
        %v558 = vpop.f32.mrb[0].mxu0
        %559 = vdwg.mxu0
        %v560 = vmul.f32 %v555, %v510
        %v561 = vpack.c.bf16 %v560, %v560
        %562 = vrot.lane.b32.xlu0 %v338, 112
        %v563 = vpop.permute.xlu0 %562
        %564 = vrot.lane.b32.xlu0 %v338, 80
        %v565 = vpop.permute.xlu0 %564
        %v567 = vsel %vm342, %v563, 0
        %v570 = vsel %vm342, %v565, 0
        %572 = vmatprep.subr.bf16.mxu0 0
        %573 = vmatpush1.bf16.xpose.msra.mxu0 %v570
        %574 = vmatprep.subr.bf16.mxu0 0
        %575 = vmatpush1.bf16.xpose.msra.mxu0 0
        %576 = vmatprep.subr.bf16.mxu0 0
        %577 = vmatpush1.bf16.xpose.msra.mxu0 0
        %578 = vmatprep.subr.bf16.mxu0 0
        %579 = vmatpush1.bf16.xpose.msra.mxu0 0
        %580 = vmatprep.subr.bf16.mxu0 0
        %581 = vmatpush1.bf16.xpose.msra.mxu0 0
        %582 = vmatprep.subr.bf16.mxu0 0
        %583 = vmatpush1.bf16.xpose.msra.mxu0 0
        %584 = vmatprep.subr.bf16.mxu0 0
        %585 = vmatpush1.bf16.xpose.msra.mxu0 0
        %586 = vmatprep.subr.bf16.mxu0 0
        %587 = vmatpush1.bf16.xpose.msra.mxu0 0
        %588 = vmatprep.subr.bf16.mxu0 0
        %589 = vmatpush1.bf16.xpose.msra.mxu0 0
        %590 = vmatprep.subr.bf16.mxu0 0
        %591 = vmatpush1.bf16.xpose.msra.mxu0 0
        %592 = vmatprep.subr.bf16.mxu0 0
        %593 = vmatpush1.bf16.xpose.msra.mxu0 0
        %594 = vmatprep.subr.bf16.mxu0 0
        %595 = vmatpush1.bf16.xpose.msra.mxu0 0
        %596 = vmatprep.subr.bf16.mxu0 0
        %597 = vmatpush1.bf16.xpose.msra.mxu0 0
        %598 = vmatprep.subr.bf16.mxu0 0
        %599 = vmatpush1.bf16.xpose.msra.mxu0 0
        %600 = vmatprep.subr.bf16.mxu0 0
        %601 = vmatpush1.bf16.xpose.msra.mxu0 0
        %602 = vmatprep.subr.bf16.mxu0 0
        %603 = vmatpush1.bf16.xpose.msra.mxu0 0
        %604 = vmatprep.mubr.bf16.mxu0 0
        %605 = vmatmul.mubr.bf16.gmra.mrb[0].mxu0 %v567
        %v606 = vpop.f32.mrb[0].mxu0
        %v607 = vadd.f32 0.0, %v606
        %v608 = vpop.f32.mrb[0].mxu0
        %v609 = vpop.f32.mrb[0].mxu0
        %v610 = vpop.f32.mrb[0].mxu0
        %611 = vdwg.mxu0
        %v612 = vsel %vm342, %v607, -inf
        %613 = vmax.xlane.f32.xlu0 %v612
        %v614 = vpop.xlane.xlu0 %613
        %v615 = vsub.f32 %v607, %v614
        %v616 = vmul.f32 %v615, 1.442695
        %v617 = vpow.pop %v616
        %v618 = vsel %vm342, %v617, 0.0
        %619 = vadd.xlane.f32.xlu0 %v618
        %v620 = vpop.xlane.xlu0 %619
        %v621 = vrcp.pop %v620
        %v622 = vpack.c.bf16 %v617, %v617
        %623 = vrot.lane.b32.xlu0 %v338, 48
        %v624 = vpop.permute.xlu0 %623
        %v626 = vsel %vm342, %v622, 0
        %v629 = vsel %vm405, %v624, 0
        %631 = vmatprep.subr.bf16.mxu0 0
        %632 = vmatpush1.bf16.msra.mxu0 %v629
        %633 = vmatprep.subr.bf16.mxu0 0
        %634 = vmatpush1.bf16.msra.mxu0 0
        %635 = vmatprep.subr.bf16.mxu0 0
        %636 = vmatpush1.bf16.msra.mxu0 0
        %637 = vmatprep.subr.bf16.mxu0 0
        %638 = vmatpush1.bf16.msra.mxu0 0
        %639 = vmatprep.subr.bf16.mxu0 0
        %640 = vmatpush1.bf16.msra.mxu0 0
        %641 = vmatprep.subr.bf16.mxu0 0
        %642 = vmatpush1.bf16.msra.mxu0 0
        %643 = vmatprep.subr.bf16.mxu0 0
        %644 = vmatpush1.bf16.msra.mxu0 0
        %645 = vmatprep.subr.bf16.mxu0 0
        %646 = vmatpush1.bf16.msra.mxu0 0
        %647 = vmatprep.subr.bf16.mxu0 0
        %648 = vmatpush1.bf16.msra.mxu0 0
        %649 = vmatprep.subr.bf16.mxu0 0
        %650 = vmatpush1.bf16.msra.mxu0 0
        %651 = vmatprep.subr.bf16.mxu0 0
        %652 = vmatpush1.bf16.msra.mxu0 0
        %653 = vmatprep.subr.bf16.mxu0 0
        %654 = vmatpush1.bf16.msra.mxu0 0
        %655 = vmatprep.subr.bf16.mxu0 0
        %656 = vmatpush1.bf16.msra.mxu0 0
        %657 = vmatprep.subr.bf16.mxu0 0
        %658 = vmatpush1.bf16.msra.mxu0 0
        %659 = vmatprep.subr.bf16.mxu0 0
        %660 = vmatpush1.bf16.msra.mxu0 0
        %661 = vmatprep.subr.bf16.mxu0 0
        %662 = vmatpush1.bf16.msra.mxu0 0
        %663 = vmatprep.mubr.bf16.mxu0 0
        %664 = vmatmul.mubr.bf16.gmra.mrb[0].mxu0 %v626
        %v665 = vpop.f32.mrb[0].mxu0
        %v666 = vadd.f32 0.0, %v665
        %v667 = vpop.f32.mrb[0].mxu0
        %v668 = vpop.f32.mrb[0].mxu0
        %v669 = vpop.f32.mrb[0].mxu0
        %670 = vdwg.mxu0
        %v671 = vmul.f32 %v666, %v621
        %v672 = vpack.c.bf16 %v671, %v671
        %673 = vrot.lane.b32.xlu0 %v338, 104
        %v674 = vpop.permute.xlu0 %673
        %675 = vrot.lane.b32.xlu0 %v338, 72
        %v676 = vpop.permute.xlu0 %675
        %v678 = vsel %vm342, %v674, 0
        %v681 = vsel %vm342, %v676, 0
        %683 = vmatprep.subr.bf16.mxu0 0
        %684 = vmatpush1.bf16.xpose.msra.mxu0 %v681
        %685 = vmatprep.subr.bf16.mxu0 0
        %686 = vmatpush1.bf16.xpose.msra.mxu0 0
        %687 = vmatprep.subr.bf16.mxu0 0
        %688 = vmatpush1.bf16.xpose.msra.mxu0 0
        %689 = vmatprep.subr.bf16.mxu0 0
        %690 = vmatpush1.bf16.xpose.msra.mxu0 0
        %691 = vmatprep.subr.bf16.mxu0 0
        %692 = vmatpush1.bf16.xpose.msra.mxu0 0
        %693 = vmatprep.subr.bf16.mxu0 0
        %694 = vmatpush1.bf16.xpose.msra.mxu0 0
        %695 = vmatprep.subr.bf16.mxu0 0
        %696 = vmatpush1.bf16.xpose.msra.mxu0 0
        %697 = vmatprep.subr.bf16.mxu0 0
        %698 = vmatpush1.bf16.xpose.msra.mxu0 0
        %699 = vmatprep.subr.bf16.mxu0 0
        %700 = vmatpush1.bf16.xpose.msra.mxu0 0
        %701 = vmatprep.subr.bf16.mxu0 0
        %702 = vmatpush1.bf16.xpose.msra.mxu0 0
        %703 = vmatprep.subr.bf16.mxu0 0
        %704 = vmatpush1.bf16.xpose.msra.mxu0 0
        %705 = vmatprep.subr.bf16.mxu0 0
        %706 = vmatpush1.bf16.xpose.msra.mxu0 0
        %707 = vmatprep.subr.bf16.mxu0 0
        %708 = vmatpush1.bf16.xpose.msra.mxu0 0
        %709 = vmatprep.subr.bf16.mxu0 0
        %710 = vmatpush1.bf16.xpose.msra.mxu0 0
        %711 = vmatprep.subr.bf16.mxu0 0
        %712 = vmatpush1.bf16.xpose.msra.mxu0 0
        %713 = vmatprep.subr.bf16.mxu0 0
        %714 = vmatpush1.bf16.xpose.msra.mxu0 0
        %715 = vmatprep.mubr.bf16.mxu0 0
        %716 = vmatmul.mubr.bf16.gmra.mrb[0].mxu0 %v678
        %v717 = vpop.f32.mrb[0].mxu0
        %v718 = vadd.f32 0.0, %v717
        %v719 = vpop.f32.mrb[0].mxu0
        %v720 = vpop.f32.mrb[0].mxu0
        %v721 = vpop.f32.mrb[0].mxu0
        %722 = vdwg.mxu0
        %v723 = vsel %vm342, %v718, -inf
        %724 = vmax.xlane.f32.xlu0 %v723
        %v725 = vpop.xlane.xlu0 %724
        %v726 = vsub.f32 %v718, %v725
        %v727 = vmul.f32 %v726, 1.442695
        %v728 = vpow.pop %v727
        %v729 = vsel %vm342, %v728, 0.0
        %730 = vadd.xlane.f32.xlu0 %v729
        %v731 = vpop.xlane.xlu0 %730
        %v732 = vrcp.pop %v731
        %v733 = vpack.c.bf16 %v728, %v728
        %734 = vrot.lane.b32.xlu0 %v338, 40
        %v735 = vpop.permute.xlu0 %734
        %v737 = vsel %vm342, %v733, 0
        %v740 = vsel %vm405, %v735, 0
        %742 = vmatprep.subr.bf16.mxu0 0
        %743 = vmatpush1.bf16.msra.mxu0 %v740
        %744 = vmatprep.subr.bf16.mxu0 0
        %745 = vmatpush1.bf16.msra.mxu0 0
        %746 = vmatprep.subr.bf16.mxu0 0
        %747 = vmatpush1.bf16.msra.mxu0 0
        %748 = vmatprep.subr.bf16.mxu0 0
        %749 = vmatpush1.bf16.msra.mxu0 0
        %750 = vmatprep.subr.bf16.mxu0 0
        %751 = vmatpush1.bf16.msra.mxu0 0
        %752 = vmatprep.subr.bf16.mxu0 0
        %753 = vmatpush1.bf16.msra.mxu0 0
        %754 = vmatprep.subr.bf16.mxu0 0
        %755 = vmatpush1.bf16.msra.mxu0 0
        %756 = vmatprep.subr.bf16.mxu0 0
        %757 = vmatpush1.bf16.msra.mxu0 0
        %758 = vmatprep.subr.bf16.mxu0 0
        %759 = vmatpush1.bf16.msra.mxu0 0
        %760 = vmatprep.subr.bf16.mxu0 0
        %761 = vmatpush1.bf16.msra.mxu0 0
        %762 = vmatprep.subr.bf16.mxu0 0
        %763 = vmatpush1.bf16.msra.mxu0 0
        %764 = vmatprep.subr.bf16.mxu0 0
        %765 = vmatpush1.bf16.msra.mxu0 0
        %766 = vmatprep.subr.bf16.mxu0 0
        %767 = vmatpush1.bf16.msra.mxu0 0
        %768 = vmatprep.subr.bf16.mxu0 0
        %769 = vmatpush1.bf16.msra.mxu0 0
        %770 = vmatprep.subr.bf16.mxu0 0
        %771 = vmatpush1.bf16.msra.mxu0 0
        %772 = vmatprep.subr.bf16.mxu0 0
        %773 = vmatpush1.bf16.msra.mxu0 0
        %774 = vmatprep.mubr.bf16.mxu0 0
        %775 = vmatmul.mubr.bf16.gmra.mrb[0].mxu0 %v737
        %v776 = vpop.f32.mrb[0].mxu0
        %v777 = vadd.f32 0.0, %v776
        %v778 = vpop.f32.mrb[0].mxu0
        %v779 = vpop.f32.mrb[0].mxu0
        %v780 = vpop.f32.mrb[0].mxu0
        %781 = vdwg.mxu0
        %v782 = vmul.f32 %v777, %v732
        %v783 = vpack.c.bf16 %v782, %v782
        %785 = vrot.lane.b32.xlu0 %v561, 8
        %v786 = vpop.permute.xlu0 %785
        %788 = vrot.lane.b32.xlu0 %v672, 16
        %v789 = vpop.permute.xlu0 %788
        %791 = vrot.lane.b32.xlu0 %v783, 24
        %v792 = vpop.permute.xlu0 %791
        %v795 = vsel %vm342, %v450, %v786
        %vm796 = vcmask 130048
        %v798 = vsel %vm796, %v795, %v789
        %vm799 = vcmask 195584
        %v801 = vsel %vm799, %v798, %v792
        %v802 = vld [vmem:[#allocation7] sm:$0xf]
        %v803 = vld [vmem:[#allocation7 + $0x4] sm:$0xf]
        %v804 = vld [vmem:[#allocation7 + $0x8] sm:$0xf]
        %v805 = vld [vmem:[#allocation7 + $0xc] sm:$0xf]
        %v806 = vld [vmem:[%s4] sm:$0x1]
        %v808 = vlaneseq
        %v809 = vshrl.u32 %v808, 7
        %v810 = vsub.s32 0, %v809
        %v811 = vrot.slane %v806, %v810
        %v817 = vunpack.c.l.b16 %v802
        %v818 = vunpack.c.l.b16 %v803
        %v819 = vunpack.c.l.b16 %v804
        %v820 = vunpack.c.l.b16 %v805
        %v821 = vpack.c.b16 %v818, %v817
        %v822 = vpack.c.b16 %v820, %v819
        %v825 = vsel %vm294, %v801, 0
        %827 = vmatprep.subr.bf16.mxu0 0
        %828 = vmatpush1.bf16.msra.mxu0 %v821
        %829 = vmatprep.subr.bf16.mxu0 0
        %830 = vmatpush1.bf16.msra.mxu0 %v822
        %831 = vmatprep.subr.bf16.mxu0 0
        %832 = vmatpush1.bf16.msra.mxu0 0
        %833 = vmatprep.subr.bf16.mxu0 0
        %834 = vmatpush1.bf16.msra.mxu0 0
        %835 = vmatprep.subr.bf16.mxu0 0
        %836 = vmatpush1.bf16.msra.mxu0 0
        %837 = vmatprep.subr.bf16.mxu0 0
        %838 = vmatpush1.bf16.msra.mxu0 0
        %839 = vmatprep.subr.bf16.mxu0 0
        %840 = vmatpush1.bf16.msra.mxu0 0
        %841 = vmatprep.subr.bf16.mxu0 0
        %842 = vmatpush1.bf16.msra.mxu0 0
        %843 = vmatprep.subr.bf16.mxu0 0
        %844 = vmatpush1.bf16.msra.mxu0 0
        %845 = vmatprep.subr.bf16.mxu0 0
        %846 = vmatpush1.bf16.msra.mxu0 0
        %847 = vmatprep.subr.bf16.mxu0 0
        %848 = vmatpush1.bf16.msra.mxu0 0
        %849 = vmatprep.subr.bf16.mxu0 0
        %850 = vmatpush1.bf16.msra.mxu0 0
        %851 = vmatprep.subr.bf16.mxu0 0
        %852 = vmatpush1.bf16.msra.mxu0 0
        %853 = vmatprep.subr.bf16.mxu0 0
        %854 = vmatpush1.bf16.msra.mxu0 0
        %855 = vmatprep.subr.bf16.mxu0 0
        %856 = vmatpush1.bf16.msra.mxu0 0
        %857 = vmatprep.subr.bf16.mxu0 0
        %858 = vmatpush1.bf16.msra.mxu0 0
        %859 = vmatprep.mubr.bf16.mxu0 0
        %860 = vmatmul.mubr.bf16.gmra.mrb[0].mxu0 %v825
        %v861 = vpop.f32.mrb[0].mxu0
        %v862 = vadd.f32 %v811, %v861
        %v863 = vpop.f32.mrb[0].mxu0
        %v864 = vpop.f32.mrb[0].mxu0
        %v865 = vpop.f32.mrb[0].mxu0
        %866 = vdwg.mxu0
        %867 = vst.msk [vmem:[%s268] sm:$0xff] %vm294, %v862
        %s868 = sand.u32 %s141, 1
        %s869 = scalar_lea.sflag [#allocation4], %s868
        %s870 = sand.u32 %s141, 1
        %s871 = smul.addr %s870, 8
        %s872 = scalar_lea.vmem [#allocation8], %s871
        // Predicated region
        $region53: #{tpu_custom_call.1} parent=39 // pred_check
          %p873 = pneg %p151
        $region54: #{tpu_custom_call.1} parent=39 // pred_check_branch
          %875 = sbr.rel (%p873) target = $region56
        $region55: #{tpu_custom_call.1} parent=39 // pred_region
          %s877 = ssub.s32 128, 128
          %878 = vsyncadd %s869, %s877
          %s879 = smul.addr %s23, 128
          %s880 = scalar_lea.hbm %s5, %s879
          %s882 = sshll.u32 %s872, 4
          %s883 = int_to_ptr.vmem [resolvable:$true] %s882
          %885 = dma.vmem_to_hbm [thread:$0]  %s883, 128, %s880, %s869
        $region56: #{tpu_custom_call.1} parent=39 // pred_fallthru
          _
      $region40: #{tpu_custom_call.1} parent=5 // pred_fallthru
        _
      %p886 = scmp.le.s32.totalorder 2, %s18
      // Predicated region
      $region57: #{tpu_custom_call.1} parent=5 // pred_check
        %p887 = pneg %p886
      $region58: #{tpu_custom_call.1} parent=5 // pred_check_branch
        %889 = sbr.rel (%p887) target = $region60
      $region59: #{tpu_custom_call.1} parent=5 // pred_region
        %s890 = ssub.s32 %s18, 2
        // Predicated region
        $region61: #{tpu_custom_call.1} parent=59 // pred_check
          %p891 = pneg %p157
        $region62: #{tpu_custom_call.1} parent=59 // pred_check_branch
          %893 = sbr.rel (%p891) target = $region64
        $region63: #{tpu_custom_call.1} parent=59 // pred_region
          %s894 = sand.u32 %s142, 1
          %s895 = scalar_lea.sflag [#allocation4], %s894
          %s896 = sand.u32 %s142, 1
          %s897 = smul.addr %s896, 8
          %s898 = scalar_lea.vmem [#allocation8], %s897
          %899 = dma.done %s895, 128
        $region64: #{tpu_custom_call.1} parent=59 // pred_fallthru
          _
      $region60: #{tpu_custom_call.1} parent=5 // pred_fallthru
        _
    $region6: #{tpu_custom_call.1} parent=1 // loop_footer
      %s22 = sadd.s32 1, %s18
    $region7: #{tpu_custom_call.1} parent=1 // loop_footer_branch
      %17 = sbr.rel target = $region3
    $region8: #{tpu_custom_call.1} parent=1 // loop_exit
      _
    %900 = vsyncpa [#allocation3], 1
    %s901 = scalar_lea.sflag [#allocation3], 1
    %902 = vsyncpa %s901, 1
    %903 = vsyncpa [#allocation6], 1
    %904 = vsyncpa [#allocation4], 1
    %s905 = scalar_lea.sflag [#allocation4], 1
    %906 = vsyncpa %s905, 1

</llo_original>
